<compile_context>
chip_gen: v6e
topology: v6e:2x2x1
jax: 0.10.0
libtpu: 0.0.40
codegen_flags: <defaults>
</compile_context>

<pallas_src>
import functools

import jax
import jax.numpy as jnp
from jax import lax
from jax.experimental import pallas as pl
from jax.experimental.pallas import tpu as pltpu

_MIB = 1024 * 1024


def _granite_mlp_kernel(x_ref, wg_ref, wu_ref, wd_ref, o_ref, acc_ref):
    """One (row_tile i, intermediate_tile j) grid step of the fused MLP.

    x_ref  : (tm, H)   activation row tile (j-invariant -> DMA'd once per i)
    wg_ref : (tj, H)   gate_proj rows, torch layout
    wu_ref : (tj, H)   up_proj rows, torch layout
    wd_ref : (H,  tj)  down_proj columns, torch layout
    o_ref  : (tm, H)   output tile (written only at the last j)
    acc_ref: (tm, H)   f32 accumulator, resident across the j (reduction) axis
    """
    j = pl.program_id(1)

    @pl.when(j == 0)
    def _init():
        acc_ref[...] = jnp.zeros_like(acc_ref)

    # Contract the trailing (H / tj) axis of both operands: x @ W^T.
    nt = (((1,), (1,)), ((), ()))
    x = x_ref[...]  # kept in the input dtype for the MXU
    gate = lax.dot_general(x, wg_ref[...], nt, preferred_element_type=jnp.float32)
    up = lax.dot_general(x, wu_ref[...], nt, preferred_element_type=jnp.float32)

    # SiLU(gate) * up in f32 (sigmoid runs on the EUP slot, essentially free).
    inter = (gate * jax.nn.sigmoid(gate)) * up

    # NOTE: inter is cast to the weight dtype for the down-proj MXU inputs
    # (bf16 weights => bf16 operands); accumulation stays in f32.
    acc_ref[...] += lax.dot_general(
        inter.astype(wd_ref.dtype), wd_ref[...], nt,
        preferred_element_type=jnp.float32)

    @pl.when(j == pl.num_programs(1) - 1)
    def _finalize():
        o_ref[...] = acc_ref[...].astype(o_ref.dtype)


def _vmem_capacity_bytes():
    """Per-generation VMEM capacity (v5e/v6e: 128 MiB, v7x: 64 MiB per TC)."""
    try:
        cap = int(pltpu.get_tpu_info().vmem_capacity_bytes)
        return max(cap, 32 * _MIB)
    except Exception:
        return 64 * _MIB  # conservative fallback (v7x-sized)


def _choose_tiles(rows, H, I, act_bytes, w_bytes, out_bytes,
                  tile_rows, tile_inter, vmem_cap):
    """Pick (tm, tj) so the pipelined VMEM footprint fits the chip's VMEM."""
    budget = int(0.85 * vmem_cap)  # leave headroom for Mosaic internal scratch

    def per_call_vmem(tm, tj):
        # Conservative: every pipelined block counted double-buffered;
        # the f32 accumulator is a single resident scratch buffer.
        x_blk = tm * H * act_bytes
        w_blk = 3 * tj * H * w_bytes        # gate rows + up rows + down cols
        o_blk = tm * H * out_bytes
        acc = tm * H * 4
        return 2 * (x_blk + w_blk + o_blk) + acc

    # Row-tile candidates, largest first: bigger tm = more reuse of each
    # streamed weight byte, which is the main roofline lever on v6e/v7x.
    if tile_rows is not None:
        tm_cands = [max(1, min(tile_rows, rows))]
    else:
        tm_cands = [t for t in (1024, 768, 512, 384, 256, 128, 64, 32, 16, 8)
                    if t <= rows]
        if not tm_cands:
            tm_cands = [rows]

    # Intermediate-tile candidates: lane-dense (multiple of 128) divisors of I.
    if tile_inter is not None:
        tj_cands = [max(1, min(tile_inter, I))]
    else:
        tj_cands = [t for t in (512, 384, 256, 128) if t <= I and I % t == 0]
        if not tj_cands:
            tj_cands = [I]  # tiny / non-divisible I: take the whole dim

    for tm in tm_cands:
        for tj in tj_cands:
            if per_call_vmem(tm, tj) <= budget:
                return tm, tj, per_call_vmem(tm, tj)
    tm, tj = tm_cands[-1], tj_cands[-1]
    return tm, tj, per_call_vmem(tm, tj)


def granite_mlp(x, w_gate_up, w_down, *, tile_rows=None, tile_inter=None):
    """Fused Granite MLP forward: down_proj(SiLU(gate_proj(x)) * up_proj(x)).

    Args:
      x:          (..., hidden) activations.  For best perf feed bf16 end to
                  end (cast once at the caller, not per step).
      w_gate_up:  (2 * intermediate, hidden) fused [gate; up] weight in torch
                  Linear layout (gate rows first, as produced by load_hook).
                  Consumed as-is -- no wrapper-side transpose / HBM repack.
      w_down:     (hidden, intermediate) down_proj weight in torch layout.
      tile_rows / tile_inter: optional overrides; by default derived from the
                  chip's VMEM capacity.
    """
    orig_shape = x.shape
    H = orig_shape[-1]
    x2d = x.reshape(-1, H)
    rows = x2d.shape[0]

    two_i, h_in = w_gate_up.shape
    assert h_in == H and two_i % 2 == 0, "w_gate_up must be (2*I, H)"
    I = two_i // 2
    assert w_down.shape == (H, I), "w_down must be (H, I)"

    # Pathological intermediate sizes (>=128 but not a multiple of 128): pad to
    # a lane-dense size rather than using a non-128-multiple tile.  The zero
    # rows/columns contribute exactly zero to the output.
    # TODO(synk): for such configs do this padding once at weight-load time.
    I_eff = I
    if I >= 128 and I % 128 != 0:
        I_eff = ((I + 127) // 128) * 128
        pad_i = I_eff - I
        zeros_w = jnp.zeros((pad_i, H), w_gate_up.dtype)
        w_gate_up = jnp.concatenate(
            [w_gate_up[:I], zeros_w, w_gate_up[I:], zeros_w], axis=0)
        w_down = jnp.pad(w_down, ((0, 0), (0, pad_i)))

    out_dtype = x.dtype
    act_bytes = jnp.dtype(x2d.dtype).itemsize
    w_bytes = jnp.dtype(w_gate_up.dtype).itemsize
    out_bytes = jnp.dtype(out_dtype).itemsize

    vmem_cap = _vmem_capacity_bytes()
    tm, tj, per_call_vmem = _choose_tiles(
        rows, H, I_eff, act_bytes, w_bytes, out_bytes,
        tile_rows, tile_inter, vmem_cap)

    # Row padding (activations only -- cheap).  Note: when rows < 8 the tile is
    # the full array dim (legal, just a masked layout).
    pad_rows = (-rows) % tm
    if pad_rows:
        x2d = jnp.pad(x2d, ((0, pad_rows), (0, 0)))
    rows_p = rows + pad_rows

    nj = I_eff // tj          # number of gate row-tiles; up tiles start at block nj
    grid = (rows_p // tm, nj)

    # VMEM limit follows the chosen tiles (+ headroom), never the full capacity.
    vmem_limit = max(min(int(0.95 * vmem_cap), per_call_vmem + 12 * _MIB),
                     16 * _MIB)

    out = pl.pallas_call(
        _granite_mlp_kernel,
        out_shape=jax.ShapeDtypeStruct((rows_p, H), out_dtype),
        grid=grid,
        in_specs=[
            pl.BlockSpec((tm, H), lambda i, j: (i, 0)),        # x rows (j-invariant)
            pl.BlockSpec((tj, H), lambda i, j: (j, 0)),        # gate_proj rows
            pl.BlockSpec((tj, H), lambda i, j: (nj + j, 0)),   # up_proj rows
            pl.BlockSpec((H, tj), lambda i, j: (0, j)),        # down_proj columns
        ],
        out_specs=pl.BlockSpec((tm, H), lambda i, j: (i, 0)),
        scratch_shapes=[pltpu.VMEM((tm, H), jnp.float32)],
        compiler_params=pltpu.CompilerParams(
            dimension_semantics=("parallel", "arbitrary"),
            vmem_limit_bytes=vmem_limit,
        ),
    )(x2d, w_gate_up, w_gate_up, w_down)

    if pad_rows:
        out = out[:rows]
    return out.reshape(orig_shape[:-1] + (H,))


if __name__ == "__main__":
    # Small demo shapes (real Granite: hidden >= 2048, intermediate >= 8192).
    batch, seq, hidden, intermediate = 2, 8, 32, 64
    initializer_range = 0.02  # config.initializer_range

    key = jax.random.PRNGKey(0)
    kx, kg, ku, kd = jax.random.split(key, 4)
    x = jax.random.normal(kx, (batch, seq, hidden), dtype=jnp.float32)
    # nn.init.normal_(w, mean=0.0, std=initializer_range), torch Linear layout.
    w_gate = initializer_range * jax.random.normal(kg, (intermediate, hidden), jnp.float32)
    w_up = initializer_range * jax.random.normal(ku, (intermediate, hidden), jnp.float32)
    w_down = initializer_range * jax.random.normal(kd, (hidden, intermediate), jnp.float32)
    # Fused gate_up_proj weight: gate rows first, then up rows (load_hook order).
    w_gate_up = jnp.concatenate([w_gate, w_up], axis=0)  # (2*I, H)

    y = granite_mlp(x, w_gate_up, w_down)
    jax.block_until_ready(y)

    # Pure-JAX reference of the forward pass.
    dot = functools.partial(jnp.dot, precision=jax.lax.Precision.HIGHEST)
    gate_ref = dot(x, w_gate.T)
    up_ref = dot(x, w_up.T)
    inter_ref = jax.nn.silu(gate_ref) * up_ref
    ref = dot(inter_ref, w_down.T)

    rel_err = jnp.max(jnp.abs(y - ref)) / (jnp.max(jnp.abs(ref)) + 1e-12)
    assert y.shape == ref.shape, f"shape mismatch {y.shape} vs {ref.shape}"
    assert float(rel_err) < 2e-2, f"mismatch vs reference: rel_err={float(rel_err)}"

    print("KERNEL_OK")
</pallas_src>

<mosaic_0001>
module attributes {stable_mosaic.version = 11 : i64} {
  func.func @_granite_mlp_kernel(%arg0: i32, %arg1: i32, %arg2: memref<16x32xf32, #tpu.memory_space<vmem>>, %arg3: memref<64x32xf32, #tpu.memory_space<vmem>>, %arg4: memref<64x32xf32, #tpu.memory_space<vmem>>, %arg5: memref<32x64xf32, #tpu.memory_space<vmem>>, %arg6: memref<16x32xf32, #tpu.memory_space<vmem>>, %arg7: memref<16x32xf32, #tpu.memory_space<vmem>>) attributes {dimension_semantics = [#tpu.dimension_semantics<parallel>, #tpu.dimension_semantics<arbitrary>], iteration_bounds = array<i64: 1, 1>, scalar_prefetch = 0 : i64, scratch_operands = 1 : i64, tpu.core_type = #tpu.core_type<tc>, window_params = [{transform_indices = @transform_0, window_bounds = array<i64: 16, 32>}, {transform_indices = @transform_1, window_bounds = array<i64: 64, 32>}, {transform_indices = @transform_2, window_bounds = array<i64: 64, 32>}, {transform_indices = @transform_3, window_bounds = array<i64: 32, 64>}, {transform_indices = @transform_4, window_bounds = array<i64: 16, 32>}]} {
    %c0_i32 = arith.constant 0 : i32
    %0 = arith.cmpi eq, %arg1, %c0_i32 : i32
    %1 = arith.extui %0 : i1 to i32
    %c0_i32_0 = arith.constant 0 : i32
    %2 = arith.cmpi ne, %1, %c0_i32_0 : i32
    scf.if %2 {
      %cst_17 = arith.constant 0.000000e+00 : f32
      %23 = vector.broadcast %cst_17 : f32 to vector<16x32xf32>
      %c0_18 = arith.constant 0 : index
      %c0_19 = arith.constant 0 : index
      %24 = vector.load %arg7[%c0_18, %c0_19] : memref<16x32xf32, #tpu.memory_space<vmem>>, vector<16x32xf32>
      tpu.vector_store %arg7[%c0_18, %c0_19], %23 {strides = array<i32>} : memref<16x32xf32, #tpu.memory_space<vmem>>, vector<16x32xf32>,
    } else {
    }
    %c0 = arith.constant 0 : index
    %c0_1 = arith.constant 0 : index
    %3 = vector.load %arg2[%c0, %c0_1] : memref<16x32xf32, #tpu.memory_space<vmem>>, vector<16x32xf32>
    %c0_2 = arith.constant 0 : index
    %c0_3 = arith.constant 0 : index
    %4 = vector.load %arg3[%c0_2, %c0_3] : memref<64x32xf32, #tpu.memory_space<vmem>>, vector<64x32xf32>
    %cst = arith.constant dense<0.000000e+00> : vector<16x64xf32>
    %5 = tpu.matmul %3, %4, %cst {dimension_numbers = #tpu.dot_dimension_numbers<[1], [1], [0], [0], [0, 0, 1, 0], [], []>} : vector<16x32xf32>, vector<64x32xf32>, vector<16x64xf32> -> vector<16x64xf32>
    %c0_4 = arith.constant 0 : index
    %c0_5 = arith.constant 0 : index
    %6 = vector.load %arg4[%c0_4, %c0_5] : memref<64x32xf32, #tpu.memory_space<vmem>>, vector<64x32xf32>
    %cst_6 = arith.constant dense<0.000000e+00> : vector<16x64xf32>
    %7 = tpu.matmul %3, %6, %cst_6 {dimension_numbers = #tpu.dot_dimension_numbers<[1], [1], [0], [0], [0, 0, 1, 0], [], []>} : vector<16x32xf32>, vector<64x32xf32>, vector<16x64xf32> -> vector<16x64xf32>
    %8 = arith.negf %5 : vector<16x64xf32>
    %9 = math.exp %8 : vector<16x64xf32>
    %cst_7 = arith.constant 1.000000e+00 : f32
    %10 = vector.broadcast %cst_7 : f32 to vector<16x64xf32>
    %11 = arith.addf %10, %9 : vector<16x64xf32>
    %12 = arith.divf %10, %11 : vector<16x64xf32>
    %13 = arith.mulf %5, %12 : vector<16x64xf32>
    %14 = arith.mulf %13, %7 : vector<16x64xf32>
    %c0_8 = arith.constant 0 : index
    %c0_9 = arith.constant 0 : index
    %15 = vector.load %arg7[%c0_8, %c0_9] : memref<16x32xf32, #tpu.memory_space<vmem>>, vector<16x32xf32>
    %c0_10 = arith.constant 0 : index
    %c0_11 = arith.constant 0 : index
    %16 = vector.load %arg5[%c0_10, %c0_11] : memref<32x64xf32, #tpu.memory_space<vmem>>, vector<32x64xf32>
    %cst_12 = arith.constant dense<0.000000e+00> : vector<16x32xf32>
    %17 = tpu.matmul %14, %16, %cst_12 {dimension_numbers = #tpu.dot_dimension_numbers<[1], [1], [0], [0], [0, 0, 1, 0], [], []>} : vector<16x64xf32>, vector<32x64xf32>, vector<16x32xf32> -> vector<16x32xf32>
    %18 = arith.addf %15, %17 : vector<16x32xf32>
    %c0_13 = arith.constant 0 : index
    %c0_14 = arith.constant 0 : index
    %19 = vector.load %arg7[%c0_13, %c0_14] : memref<16x32xf32, #tpu.memory_space<vmem>>, vector<16x32xf32>
    tpu.vector_store %arg7[%c0_13, %c0_14], %18 {strides = array<i32>} : memref<16x32xf32, #tpu.memory_space<vmem>>, vector<16x32xf32>,
    %c0_i32_15 = arith.constant 0 : i32
    %20 = arith.cmpi eq, %arg1, %c0_i32_15 : i32
    %21 = arith.extui %20 : i1 to i32
    %c0_i32_16 = arith.constant 0 : i32
    %22 = arith.cmpi ne, %21, %c0_i32_16 : i32
    scf.if %22 {
      %c0_17 = arith.constant 0 : index
      %c0_18 = arith.constant 0 : index
      %23 = vector.load %arg7[%c0_17, %c0_18] : memref<16x32xf32, #tpu.memory_space<vmem>>, vector<16x32xf32>
      %c0_19 = arith.constant 0 : index
      %c0_20 = arith.constant 0 : index
      %24 = vector.load %arg6[%c0_19, %c0_20] : memref<16x32xf32, #tpu.memory_space<vmem>>, vector<16x32xf32>
      tpu.vector_store %arg6[%c0_19, %c0_20], %23 {strides = array<i32>} : memref<16x32xf32, #tpu.memory_space<vmem>>, vector<16x32xf32>,
    } else {
    }
    return
  }
  func.func @transform_0(%arg0: i32, %arg1: i32) -> (i32, i32) {
    %c0_i32 = arith.constant 0 : i32
    %c0_i32_0 = arith.constant 0 : i32
    return %arg0, %c0_i32 : i32, i32
  }
  func.func @transform_1(%arg0: i32, %arg1: i32) -> (i32, i32) {
    %c0_i32 = arith.constant 0 : i32
    %c0_i32_0 = arith.constant 0 : i32
    return %arg1, %c0_i32 : i32, i32
  }
  func.func @transform_2(%arg0: i32, %arg1: i32) -> (i32, i32) {
    %c1_i32 = arith.constant 1 : i32
    %0 = arith.addi %c1_i32, %arg1 : i32
    %c0_i32 = arith.constant 0 : i32
    %c0_i32_0 = arith.constant 0 : i32
    return %0, %c0_i32 : i32, i32
  }
  func.func @transform_3(%arg0: i32, %arg1: i32) -> (i32, i32) {
    %c0_i32 = arith.constant 0 : i32
    %c0_i32_0 = arith.constant 0 : i32
    return %c0_i32, %arg1 : i32, i32
  }
  func.func @transform_4(%arg0: i32, %arg1: i32) -> (i32, i32) {
    %c0_i32 = arith.constant 0 : i32
    %c0_i32_0 = arith.constant 0 : i32
    return %arg0, %c0_i32 : i32, i32
  }
}

</mosaic_0001>

<llo_original>
// kernel: tpu_custom_call.1
$region0: #{tpu_custom_call.1}
  #allocation0 [shape = 'u32[]', space=smem, size = 0x4, offset = 0x4, fixed_abs, tag = 'smem constant byte address 0x4 - core index']
  #allocation1 [shape = 'u32[144,128]{1,0:T(1,128)}', space=vmem, size = 0x12000, scoped, tag = 'internal scratch']
  #allocation2 [shape = 'f32[16,32]{1,0:T(8,128)}', space=vmem, size = 0x2000, scoped, tag = 'scratch operand']
  %s0 = inlined_call_operand.vmem [shape: f32[16,32], index: 0, kind: input, shape index: {}]
  %s1 = inlined_call_operand.vmem [shape: f32[128,32], index: 1, kind: input, shape index: {}]
  %s2 = inlined_call_operand.vmem [shape: f32[128,32], index: 2, kind: input, shape index: {}]
  %s3 = inlined_call_operand.vmem [shape: f32[32,64], index: 3, kind: input, shape index: {}]
  %s4 = inlined_call_operand.hbm [shape: f32[16,32], index: 4, kind: output, shape index: {}]
  %s5 = sld [smem:[#allocation0]]
  $region34: #{tpu_custom_call.1} parent=0
    _
  %s7 = ssub.s32 1, %s5
  %s8 = scalar_select 0, %s7, %s5
  $region1: #{tpu_custom_call.1} parent=0
    #allocation3 [shape = 'u8[8192]{0}', space=vmem, size = 0x2000, scoped, tag = 'output window, operand 0, single buffered']
    #allocation4 [shape = 's32[1]{0}', space=sflag, size = 0x4, scoped, tag = 'scoped memory for tpu_custom_call.1']
    %9 = vsyncpa [#allocation4], 0
    // Predicated region
    $region2: #{tpu_custom_call.1} parent=1 // pred_check
      _
    $region3: #{tpu_custom_call.1} parent=1 // pred_check_branch
      %11 = sbr.rel (0) target = $region5
    $region4: #{tpu_custom_call.1} parent=1 // pred_region
      _
    $region5: #{tpu_custom_call.1} parent=1 // pred_fallthru
      _
    // Predicated region
    $region6: #{tpu_custom_call.1} parent=1 // pred_check
      _
    $region7: #{tpu_custom_call.1} parent=1 // pred_check_branch
      %13 = sbr.rel (0) target = $region9
    $region8: #{tpu_custom_call.1} parent=1 // pred_region
      _
    $region9: #{tpu_custom_call.1} parent=1 // pred_fallthru
      _
    // Predicated region
    $region10: #{tpu_custom_call.1} parent=1 // pred_check
      _
    $region11: #{tpu_custom_call.1} parent=1 // pred_check_branch
      %15 = sbr.rel (0) target = $region13
    $region12: #{tpu_custom_call.1} parent=1 // pred_region
      %s16 = sadd.s32 0, 1
      %s17 = smul.u32 8, %s16
      %p18 = scmp.lt.s32.totalorder %s17, 15
      %s19 = scalar_select %p18, %s17, 15
      %s20 = smul.addr %s19, 8
      %s21 = scalar_lea.vmem %s2, %s20
      %s22 = sadd.s32 0, 1
      %s23 = smul.u32 8, %s22
    $region13: #{tpu_custom_call.1} parent=1 // pred_fallthru
      _
    // Predicated region
    $region14: #{tpu_custom_call.1} parent=1 // pred_check
      _
    $region15: #{tpu_custom_call.1} parent=1 // pred_check_branch
      %25 = sbr.rel (0) target = $region17
    $region16: #{tpu_custom_call.1} parent=1 // pred_region
      _
    $region17: #{tpu_custom_call.1} parent=1 // pred_fallthru
      _
    %s26 = sadd.s32 0, 1
    %s27 = smul.u32 8, %s26
    %p28 = scmp.lt.s32.totalorder %s27, 15
    %s29 = scalar_select %p28, %s27, 15
    %s30 = smul.addr %s29, 8
    %s31 = scalar_lea.vmem %s2, %s30
    %s32 = sadd.s32 0, 1
    %s33 = smul.u32 8, %s32
    %p34 = scmp.lt.s32.totalorder %s33, 15
    %s35 = scalar_select %p34, %s33, 15
    %s36 = smul.addr %s35, 8
    %s37 = scalar_lea.vmem %s2, %s36
    %s38 = sadd.s32 0, 1
    %s39 = smul.u32 8, %s38
    %p40 = scmp.eq.s32.totalorder 0, 0
    // Predicated region
    $region18: #{tpu_custom_call.1} parent=1 // pred_check
      %p41 = pneg %p40
    $region19: #{tpu_custom_call.1} parent=1 // pred_check_branch
      %43 = sbr.rel (%p41) target = $region21
    $region20: #{tpu_custom_call.1} parent=1 // pred_region
      %vm44 = vcmask 261120
      %45 = vst.msk [vmem:[#allocation2] sm:$0xff] %vm44, 0.0
      %46 = vst.msk [vmem:[#allocation2 + $0x8] sm:$0xff] %vm44, 0.0
    $region21: #{tpu_custom_call.1} parent=1 // pred_fallthru
      _
    %v47 = vld [vmem:[%s0] sm:$0xff]
    %v48 = vld [vmem:[%s0 + $0x8] sm:$0xff]
    %v49 = vld [vmem:[%s1] sm:$0xff]
    %v50 = vld [vmem:[%s1 + $0x8] sm:$0xff]
    %v51 = vld [vmem:[%s1 + $0x10] sm:$0xff]
    %v52 = vld [vmem:[%s1 + $0x18] sm:$0xff]
    %v53 = vld [vmem:[%s1 + $0x20] sm:$0xff]
    %v54 = vld [vmem:[%s1 + $0x28] sm:$0xff]
    %v55 = vld [vmem:[%s1 + $0x30] sm:$0xff]
    %v56 = vld [vmem:[%s1 + $0x38] sm:$0xff]
    %vm57 = vcmask 261120
    %v59 = vsel %vm57, %v47, 0
    %v62 = vsel %vm57, %v48, 0
    %v65 = vsel %vm57, %v49, 0
    %v68 = vsel %vm57, %v50, 0
    %v71 = vsel %vm57, %v51, 0
    %v74 = vsel %vm57, %v52, 0
    %v77 = vsel %vm57, %v53, 0
    %v80 = vsel %vm57, %v54, 0
    %v83 = vsel %vm57, %v55, 0
    %v86 = vsel %vm57, %v56, 0
    %88 = vmatprep.subr.mxu0 0.0
    %89 = vmatpush1.xpose.msra.mxu0 0.0
    %90 = vmatprep.subr.mxu0 0.0
    %91 = vmatpush1.xpose.msra.mxu0 0.0
    %92 = vmatprep.subr.mxu0 0.0
    %93 = vmatpush1.xpose.msra.mxu0 0.0
    %94 = vmatprep.subr.mxu0 0.0
    %95 = vmatpush1.xpose.msra.mxu0 0.0
    %96 = vmatprep.subr.mxu0 0.0
    %97 = vmatpush1.xpose.msra.mxu0 0.0
    %98 = vmatprep.subr.mxu0 0.0
    %99 = vmatpush1.xpose.msra.mxu0 0.0
    %100 = vmatprep.subr.mxu0 0.0
    %101 = vmatpush1.xpose.msra.mxu0 0.0
    %102 = vmatprep.subr.mxu0 0.0
    %103 = vmatpush1.xpose.msra.mxu0 0.0
    %104 = vmatprep.subr.mxu0 0.0
    %105 = vmatpush1.xpose.msra.mxu0 %v86
    %106 = vmatprep.subr.mxu0 0.0
    %107 = vmatpush1.xpose.msra.mxu0 %v83
    %108 = vmatprep.subr.mxu0 0.0
    %109 = vmatpush1.xpose.msra.mxu0 %v80
    %110 = vmatprep.subr.mxu0 0.0
    %111 = vmatpush1.xpose.msra.mxu0 %v77
    %112 = vmatprep.subr.mxu0 0.0
    %113 = vmatpush1.xpose.msra.mxu0 %v74
    %114 = vmatprep.subr.mxu0 0.0
    %115 = vmatpush1.xpose.msra.mxu0 %v71
    %116 = vmatprep.subr.mxu0 0.0
    %117 = vmatpush1.xpose.msra.mxu0 %v68
    %118 = vmatprep.subr.mxu0 0.0
    %119 = vmatpush1.xpose.msra.mxu0 %v65
    %120 = vmatprep.subr.mxu0 0.0
    %121 = vmatpush2.xpose.msra.mxu0 0.0
    %122 = vmatprep.subr.mxu0 0.0
    %123 = vmatpush2.xpose.msra.mxu0 0.0
    %124 = vmatprep.subr.mxu0 0.0
    %125 = vmatpush2.xpose.msra.mxu0 0.0
    %126 = vmatprep.subr.mxu0 0.0
    %127 = vmatpush2.xpose.msra.mxu0 0.0
    %128 = vmatprep.subr.mxu0 0.0
    %129 = vmatpush2.xpose.msra.mxu0 0.0
    %130 = vmatprep.subr.mxu0 0.0
    %131 = vmatpush2.xpose.msra.mxu0 0.0
    %132 = vmatprep.subr.mxu0 0.0
    %133 = vmatpush2.xpose.msra.mxu0 0.0
    %134 = vmatprep.subr.mxu0 0.0
    %135 = vmatpush2.xpose.msra.mxu0 0.0
    %136 = vmatprep.subr.mxu0 0.0
    %137 = vmatpush2.xpose.msra.mxu0 0.0
    %138 = vmatprep.subr.mxu0 0.0
    %139 = vmatpush2.xpose.msra.mxu0 0.0
    %140 = vmatprep.subr.mxu0 0.0
    %141 = vmatpush2.xpose.msra.mxu0 0.0
    %142 = vmatprep.subr.mxu0 0.0
    %143 = vmatpush2.xpose.msra.mxu0 0.0
    %144 = vmatprep.subr.mxu0 0.0
    %145 = vmatpush2.xpose.msra.mxu0 0.0
    %146 = vmatprep.subr.mxu0 0.0
    %147 = vmatpush2.xpose.msra.mxu0 0.0
    %148 = vmatprep.subr.mxu0 0.0
    %149 = vmatpush2.xpose.msra.mxu0 0.0
    %150 = vmatprep.subr.mxu0 0.0
    %151 = vmatpush2.xpose.msra.mxu0 0.0
    %152 = vmatprep.mubr.f32.mxu0 0.0
    %153 = vmatmul.mubr.f32.gmra.mxu0 %v59
    %v154 = vpop.f32.mrf.mxu0
    %v155 = vadd.f32 0.0, %v154
    %v156 = vpop.f32.mrf.mxu0
    %157 = vmatprep.mubr.f32.mxu0 0.0
    %158 = vmatmul.mubr.f32.gmra.mxu0 %v62
    %v159 = vpop.f32.mrf.mxu0
    %v160 = vadd.f32 0.0, %v159
    %v161 = vpop.f32.mrf.mxu0
    %162 = vdwg.mxu0
    %v163 = vld [vmem:[%s37] sm:$0xff]
    %v164 = vld [vmem:[%s37 + $0x8] sm:$0xff]
    %v165 = vld [vmem:[%s37 + $0x10] sm:$0xff]
    %v166 = vld [vmem:[%s37 + $0x18] sm:$0xff]
    %v167 = vld [vmem:[%s37 + $0x20] sm:$0xff]
    %v168 = vld [vmem:[%s37 + $0x28] sm:$0xff]
    %v169 = vld [vmem:[%s37 + $0x30] sm:$0xff]
    %v170 = vld [vmem:[%s37 + $0x38] sm:$0xff]
    %v172 = vsel %vm57, %v163, 0
    %v175 = vsel %vm57, %v164, 0
    %v178 = vsel %vm57, %v165, 0
    %v181 = vsel %vm57, %v166, 0
    %v184 = vsel %vm57, %v167, 0
    %v187 = vsel %vm57, %v168, 0
    %v190 = vsel %vm57, %v169, 0
    %v193 = vsel %vm57, %v170, 0
    %195 = vmatprep.subr.mxu0 0.0
    %196 = vmatpush1.xpose.msra.mxu0 0.0
    %197 = vmatprep.subr.mxu0 0.0
    %198 = vmatpush1.xpose.msra.mxu0 0.0
    %199 = vmatprep.subr.mxu0 0.0
    %200 = vmatpush1.xpose.msra.mxu0 0.0
    %201 = vmatprep.subr.mxu0 0.0
    %202 = vmatpush1.xpose.msra.mxu0 0.0
    %203 = vmatprep.subr.mxu0 0.0
    %204 = vmatpush1.xpose.msra.mxu0 0.0
    %205 = vmatprep.subr.mxu0 0.0
    %206 = vmatpush1.xpose.msra.mxu0 0.0
    %207 = vmatprep.subr.mxu0 0.0
    %208 = vmatpush1.xpose.msra.mxu0 0.0
    %209 = vmatprep.subr.mxu0 0.0
    %210 = vmatpush1.xpose.msra.mxu0 0.0
    %211 = vmatprep.subr.mxu0 0.0
    %212 = vmatpush1.xpose.msra.mxu0 %v193
    %213 = vmatprep.subr.mxu0 0.0
    %214 = vmatpush1.xpose.msra.mxu0 %v190
    %215 = vmatprep.subr.mxu0 0.0
    %216 = vmatpush1.xpose.msra.mxu0 %v187
    %217 = vmatprep.subr.mxu0 0.0
    %218 = vmatpush1.xpose.msra.mxu0 %v184
    %219 = vmatprep.subr.mxu0 0.0
    %220 = vmatpush1.xpose.msra.mxu0 %v181
    %221 = vmatprep.subr.mxu0 0.0
    %222 = vmatpush1.xpose.msra.mxu0 %v178
    %223 = vmatprep.subr.mxu0 0.0
    %224 = vmatpush1.xpose.msra.mxu0 %v175
    %225 = vmatprep.subr.mxu0 0.0
    %226 = vmatpush1.xpose.msra.mxu0 %v172
    %227 = vmatprep.subr.mxu0 0.0
    %228 = vmatpush2.xpose.msra.mxu0 0.0
    %229 = vmatprep.subr.mxu0 0.0
    %230 = vmatpush2.xpose.msra.mxu0 0.0
    %231 = vmatprep.subr.mxu0 0.0
    %232 = vmatpush2.xpose.msra.mxu0 0.0
    %233 = vmatprep.subr.mxu0 0.0
    %234 = vmatpush2.xpose.msra.mxu0 0.0
    %235 = vmatprep.subr.mxu0 0.0
    %236 = vmatpush2.xpose.msra.mxu0 0.0
    %237 = vmatprep.subr.mxu0 0.0
    %238 = vmatpush2.xpose.msra.mxu0 0.0
    %239 = vmatprep.subr.mxu0 0.0
    %240 = vmatpush2.xpose.msra.mxu0 0.0
    %241 = vmatprep.subr.mxu0 0.0
    %242 = vmatpush2.xpose.msra.mxu0 0.0
    %243 = vmatprep.subr.mxu0 0.0
    %244 = vmatpush2.xpose.msra.mxu0 0.0
    %245 = vmatprep.subr.mxu0 0.0
    %246 = vmatpush2.xpose.msra.mxu0 0.0
    %247 = vmatprep.subr.mxu0 0.0
    %248 = vmatpush2.xpose.msra.mxu0 0.0
    %249 = vmatprep.subr.mxu0 0.0
    %250 = vmatpush2.xpose.msra.mxu0 0.0
    %251 = vmatprep.subr.mxu0 0.0
    %252 = vmatpush2.xpose.msra.mxu0 0.0
    %253 = vmatprep.subr.mxu0 0.0
    %254 = vmatpush2.xpose.msra.mxu0 0.0
    %255 = vmatprep.subr.mxu0 0.0
    %256 = vmatpush2.xpose.msra.mxu0 0.0
    %257 = vmatprep.subr.mxu0 0.0
    %258 = vmatpush2.xpose.msra.mxu0 0.0
    %259 = vmatprep.mubr.f32.mxu0 0.0
    %260 = vmatmul.mubr.f32.gmra.mxu0 %v59
    %v261 = vpop.f32.mrf.mxu0
    %v262 = vadd.f32 0.0, %v261
    %v263 = vpop.f32.mrf.mxu0
    %264 = vmatprep.mubr.f32.mxu0 0.0
    %265 = vmatmul.mubr.f32.gmra.mxu0 %v62
    %v266 = vpop.f32.mrf.mxu0
    %v267 = vadd.f32 0.0, %v266
    %v268 = vpop.f32.mrf.mxu0
    %269 = vdwg.mxu0
    %v270 = vxor.u32 %v155, 2147483648
    %v271 = vxor.u32 %v160, 2147483648
    %v272 = vmul.f32 %v270, 1.442695
    %v273 = vpow.pop %v272
    %v274 = vmul.f32 %v271, 1.442695
    %v275 = vpow.pop %v274
    %v276 = vadd.f32 %v273, 1.0
    %v277 = vadd.f32 %v275, 1.0
    %v278 = vrcp.pop %v276
    %v279 = vmul.f32 1.0, %v278
    %v280 = vrcp.pop %v277
    %v281 = vmul.f32 1.0, %v280
    %v282 = vmul.f32 %v155, %v279
    %v283 = vmul.f32 %v160, %v281
    %v284 = vmul.f32 %v282, %v262
    %v285 = vmul.f32 %v283, %v267
    %v286 = vld [vmem:[#allocation2] sm:$0xff]
    %v287 = vld [vmem:[#allocation2 + $0x8] sm:$0xff]
    %v288 = vld [vmem:[%s3] sm:$0xff]
    %v289 = vld [vmem:[%s3 + $0x8] sm:$0xff]
    %v290 = vld [vmem:[%s3 + $0x10] sm:$0xff]
    %v291 = vld [vmem:[%s3 + $0x18] sm:$0xff]
    %vm292 = vcmask 523264
    %v294 = vsel %vm292, %v284, 0
    %v297 = vsel %vm292, %v285, 0
    %v300 = vsel %vm292, %v288, 0
    %v303 = vsel %vm292, %v289, 0
    %v306 = vsel %vm292, %v290, 0
    %v309 = vsel %vm292, %v291, 0
    %311 = vmatprep.subr.mxu0 0.0
    %312 = vmatpush1.xpose.msra.mxu0 0.0
    %313 = vmatprep.subr.mxu0 0.0
    %314 = vmatpush1.xpose.msra.mxu0 0.0
    %315 = vmatprep.subr.mxu0 0.0
    %316 = vmatpush1.xpose.msra.mxu0 0.0
    %317 = vmatprep.subr.mxu0 0.0
    %318 = vmatpush1.xpose.msra.mxu0 0.0
    %319 = vmatprep.subr.mxu0 0.0
    %320 = vmatpush1.xpose.msra.mxu0 0.0
    %321 = vmatprep.subr.mxu0 0.0
    %322 = vmatpush1.xpose.msra.mxu0 0.0
    %323 = vmatprep.subr.mxu0 0.0
    %324 = vmatpush1.xpose.msra.mxu0 0.0
    %325 = vmatprep.subr.mxu0 0.0
    %326 = vmatpush1.xpose.msra.mxu0 0.0
    %327 = vmatprep.subr.mxu0 0.0
    %328 = vmatpush1.xpose.msra.mxu0 0.0
    %329 = vmatprep.subr.mxu0 0.0
    %330 = vmatpush1.xpose.msra.mxu0 0.0
    %331 = vmatprep.subr.mxu0 0.0
    %332 = vmatpush1.xpose.msra.mxu0 0.0
    %333 = vmatprep.subr.mxu0 0.0
    %334 = vmatpush1.xpose.msra.mxu0 0.0
    %335 = vmatprep.subr.mxu0 0.0
    %336 = vmatpush1.xpose.msra.mxu0 %v309
    %337 = vmatprep.subr.mxu0 0.0
    %338 = vmatpush1.xpose.msra.mxu0 %v306
    %339 = vmatprep.subr.mxu0 0.0
    %340 = vmatpush1.xpose.msra.mxu0 %v303
    %341 = vmatprep.subr.mxu0 0.0
    %342 = vmatpush1.xpose.msra.mxu0 %v300
    %343 = vmatprep.subr.mxu0 0.0
    %344 = vmatpush2.xpose.msra.mxu0 0.0
    %345 = vmatprep.subr.mxu0 0.0
    %346 = vmatpush2.xpose.msra.mxu0 0.0
    %347 = vmatprep.subr.mxu0 0.0
    %348 = vmatpush2.xpose.msra.mxu0 0.0
    %349 = vmatprep.subr.mxu0 0.0
    %350 = vmatpush2.xpose.msra.mxu0 0.0
    %351 = vmatprep.subr.mxu0 0.0
    %352 = vmatpush2.xpose.msra.mxu0 0.0
    %353 = vmatprep.subr.mxu0 0.0
    %354 = vmatpush2.xpose.msra.mxu0 0.0
    %355 = vmatprep.subr.mxu0 0.0
    %356 = vmatpush2.xpose.msra.mxu0 0.0
    %357 = vmatprep.subr.mxu0 0.0
    %358 = vmatpush2.xpose.msra.mxu0 0.0
    %359 = vmatprep.subr.mxu0 0.0
    %360 = vmatpush2.xpose.msra.mxu0 0.0
    %361 = vmatprep.subr.mxu0 0.0
    %362 = vmatpush2.xpose.msra.mxu0 0.0
    %363 = vmatprep.subr.mxu0 0.0
    %364 = vmatpush2.xpose.msra.mxu0 0.0
    %365 = vmatprep.subr.mxu0 0.0
    %366 = vmatpush2.xpose.msra.mxu0 0.0
    %367 = vmatprep.subr.mxu0 0.0
    %368 = vmatpush2.xpose.msra.mxu0 0.0
    %369 = vmatprep.subr.mxu0 0.0
    %370 = vmatpush2.xpose.msra.mxu0 0.0
    %371 = vmatprep.subr.mxu0 0.0
    %372 = vmatpush2.xpose.msra.mxu0 0.0
    %373 = vmatprep.subr.mxu0 0.0
    %374 = vmatpush2.xpose.msra.mxu0 0.0
    %375 = vmatprep.mubr.f32.mxu0 0.0
    %376 = vmatmul.mubr.f32.gmra.mxu0 %v294
    %v377 = vpop.f32.mrf.mxu0
    %v378 = vadd.f32 0.0, %v377
    %v379 = vpop.f32.mrf.mxu0
    %380 = vmatprep.mubr.f32.mxu0 0.0
    %381 = vmatmul.mubr.f32.gmra.mxu0 %v297
    %v382 = vpop.f32.mrf.mxu0
    %v383 = vadd.f32 0.0, %v382
    %v384 = vpop.f32.mrf.mxu0
    %385 = vdwg.mxu0
    %v386 = vadd.f32 %v286, %v378
    %v387 = vadd.f32 %v287, %v383
    %388 = vst.msk [vmem:[#allocation2] sm:$0xff] %vm57, %v386
    %389 = vst.msk [vmem:[#allocation2 + $0x8] sm:$0xff] %vm57, %v387
    // Predicated region
    $region22: #{tpu_custom_call.1} parent=1 // pred_check
      %p390 = pneg %p40
    $region23: #{tpu_custom_call.1} parent=1 // pred_check_branch
      %392 = sbr.rel (%p390) target = $region25
    $region24: #{tpu_custom_call.1} parent=1 // pred_region
      %v393 = vld [vmem:[#allocation2] sm:$0xff]
      %v394 = vld [vmem:[#allocation2 + $0x8] sm:$0xff]
      %395 = vst.msk [vmem:[#allocation3] sm:$0xff] %vm57, %v393
      %396 = vst.msk [vmem:[#allocation3 + $0x8] sm:$0xff] %vm57, %v394
    $region25: #{tpu_custom_call.1} parent=1 // pred_fallthru
      _
    // Predicated region
    $region26: #{tpu_custom_call.1} parent=1 // pred_check
      _
    $region27: #{tpu_custom_call.1} parent=1 // pred_check_branch
      %398 = sbr.rel (0) target = $region29
    $region28: #{tpu_custom_call.1} parent=1 // pred_region
      %s400 = ssub.s32 256, 256
      %401 = vsyncadd [#allocation4], %s400
      %s402 = sshll.u32 [#allocation3], 4
      %s403 = int_to_ptr.vmem [resolvable:$true] %s402
      %408 = dma.vmem_to_hbm [thread:$0]  %s403, 256, %s4, [#allocation4], 128, 128, 8
    $region29: #{tpu_custom_call.1} parent=1 // pred_fallthru
      _
    // Predicated region
    $region30: #{tpu_custom_call.1} parent=1 // pred_check
      _
    $region31: #{tpu_custom_call.1} parent=1 // pred_check_branch
      %410 = sbr.rel (0) target = $region33
    $region32: #{tpu_custom_call.1} parent=1 // pred_region
      %411 = dma.done [#allocation4], 256
    $region33: #{tpu_custom_call.1} parent=1 // pred_fallthru
      _
    %412 = vsyncpa [#allocation4], 1

</llo_original>
